<compile_context>
chip_gen: v6e
topology: v6e:2x2x1
jax: 0.10.0
libtpu: 0.0.40
codegen_flags: <defaults>
</compile_context>

<pallas_src>
import functools

import jax
import jax.numpy as jnp
from jax import lax
from jax.experimental import pallas as pl
from jax.experimental.pallas import tpu as pltpu

NUM_CORES = 2  # leading "parallel" grid axis (v7x dual-TC); serializes on 1-TC chips


def _global_sa_kernel(off_ref, xp_ref,
                      w1, b1, w2, b2, w3, b3, g3, be3,
                      out_ref, acc_ref, *, num_batches, tile_n):
    """One N-tile of: fused 3-layer MLP + per-batch (segment) max pool.

    off_ref: (B+1,) i32 SMEM per-batch start offsets (scalar prefetch)
    xp_ref:  (TILE_N, C_pad) f32 tile of concatenated [x, pos] (zero padded)
    w*:      bf16 linear weights (BN of layers 1-2 already folded in)
    b*:      f32 biases; g3/be3: (1, C_out) final folded BN scale / shift
    out_ref: (B, C_out) pooled output slice for this core (leading axis squeezed)
    acc_ref: (B, C_out) f32 VMEM running-max accumulator
    """
    c = pl.program_id(0)          # core slice of the N-tiles ("parallel")
    i = pl.program_id(1)          # tile index within this core ("arbitrary")
    n_inner = pl.num_programs(1)

    @pl.when(i == 0)
    def _():
        acc_ref[...] = jnp.full_like(acc_ref, -jnp.inf)

    # Fused MLP: bf16 MXU operands, f32 accumulation / elementwise.
    h = xp_ref[...]
    h = jnp.maximum(
        jnp.dot(h.astype(jnp.bfloat16), w1[...],
                preferred_element_type=jnp.float32) + b1[...], 0.0)
    h = jnp.maximum(
        jnp.dot(h.astype(jnp.bfloat16), w2[...],
                preferred_element_type=jnp.float32) + b2[...], 0.0)
    h = jnp.maximum(
        jnp.dot(h.astype(jnp.bfloat16), w3[...],
                preferred_element_type=jnp.float32) + b3[...], 0.0)
    h = h * g3[...] + be3[...]                       # final BN (eval, folded)

    # Global row index of every row in this tile.
    row0 = (c * n_inner + i) * tile_n
    rows = row0 + lax.broadcasted_iota(jnp.int32, (tile_n, 1), 0)

    # Per-batch masked maxima for this tile, built in registers; padded rows
    # (global index >= off[B]) never satisfy any mask, so they contribute -inf.
    neg_inf = jnp.float32(-jnp.inf)
    maxes = []
    for b in range(num_batches):                     # B is small & static
        lo = off_ref[b]
        hi = off_ref[b + 1]
        mask = jnp.logical_and(rows >= lo, rows < hi)        # (TILE_N, 1)
        seg = jnp.where(mask, h, neg_inf)
        maxes.append(jnp.max(seg, axis=0, keepdims=True))    # (1, C_out)
    tile_acc = jnp.concatenate(maxes, axis=0)                # (B, C_out)

    # Single full-width accumulator update per tile (no per-row RMWs).
    acc_ref[...] = jnp.maximum(acc_ref[...], tile_acc)

    @pl.when(i == n_inner - 1)
    def _():
        out_ref[...] = acc_ref[...]                  # one lane-dense store


def global_sa_forward(x, pos, batch, params, num_batches, tile_n=4096):
    """JAX wrapper reproducing GlobalSAModule.forward (eval-mode BN).

    params: list of 3 tuples (w (cin,cout), b, gamma, beta, rmean, rvar, eps).
    Returns (x_pooled (B, C_out) f32, pos_zeros (B, 3), batch_arange (B,)).
    """
    xp = jnp.concatenate([x, pos], axis=1).astype(jnp.float32)
    n, c = xp.shape

    # --- lane / sublane / tile padding ---------------------------------------
    c_pad = max(8, -(-c // 8) * 8)
    tile_n = int(min(tile_n, max(8, -(-n // 8) * 8)))
    tile_n = max(8, (tile_n // 8) * 8)
    n_tiles = -(-n // tile_n)
    n_inner = -(-n_tiles // NUM_CORES)               # tiles per core
    n_pad = NUM_CORES * n_inner * tile_n
    xp = jnp.pad(xp, ((0, n_pad - n), (0, c_pad - c)))

    # --- fold BatchNorm running stats; fold BN(i) into Lin(i+1) --------------
    folded = []
    for (w, b, gamma, beta, rmean, rvar, eps) in params:
        g_eff = (gamma / jnp.sqrt(rvar + eps)).astype(jnp.float32)
        b_eff = (beta - rmean * g_eff).astype(jnp.float32)
        folded.append((w.astype(jnp.float32), b.astype(jnp.float32),
                       g_eff, b_eff))

    (w1, b1, g1, be1), (w2, b2, g2, be2), (w3, b3, g3, be3) = folded
    w1 = jnp.pad(w1, ((0, c_pad - c), (0, 0)))        # pad contraction dim
    w2f = g1[:, None] * w2                            # exact BN1 fold
    b2f = be1 @ w2 + b2
    w3f = g2[:, None] * w3                            # exact BN2 fold
    b3f = be2 @ w3 + b3
    c_out = w3f.shape[1]

    # Matmul operands go to the MXU in bf16; everything else stays f32.
    flat = [w1.astype(jnp.bfloat16), b1.reshape(1, -1),
            w2f.astype(jnp.bfloat16), b2f.reshape(1, -1),
            w3f.astype(jnp.bfloat16), b3f.reshape(1, -1),
            g3.reshape(1, -1), be3.reshape(1, -1)]

    # --- per-batch offsets (batch assumed sorted) -----------------------------
    offsets = jnp.searchsorted(
        batch.astype(jnp.int32),
        jnp.arange(num_batches + 1, dtype=jnp.int32)).astype(jnp.int32)

    kernel = functools.partial(_global_sa_kernel,
                               num_batches=num_batches, tile_n=tile_n)

    grid_spec = pltpu.PrefetchScalarGridSpec(
        num_scalar_prefetch=1,
        grid=(NUM_CORES, n_inner),
        in_specs=[pl.BlockSpec((tile_n, c_pad),
                               lambda cc, i, off: (cc * n_inner + i, 0))]
                 + [pl.BlockSpec(a.shape, lambda cc, i, off: (0, 0))
                    for a in flat],
        out_specs=pl.BlockSpec((None, num_batches, c_out),
                               lambda cc, i, off: (cc, 0, 0)),
        scratch_shapes=[pltpu.VMEM((num_batches, c_out), jnp.float32)],
    )

    # VMEM: double-buffered input + f32/bf16 intermediates + headroom;
    # clamp to [32, 64] MiB so it fits every generation (v7x has 64 MiB).
    vmem_est = 2 * tile_n * c_pad * 4 + 8 * tile_n * c_out * 4 + (2 << 20)
    vmem_limit = int(min(max(vmem_est, 32 << 20), 64 << 20))

    out = pl.pallas_call(
        kernel,
        out_shape=jax.ShapeDtypeStruct((NUM_CORES, num_batches, c_out),
                                       jnp.float32),
        grid_spec=grid_spec,
        compiler_params=pltpu.CompilerParams(
            dimension_semantics=("parallel", "arbitrary"),
            vmem_limit_bytes=vmem_limit),
    )(offsets, xp, *flat)

    out_x = jnp.max(out, axis=0)                     # combine per-core partials
    out_pos = jnp.zeros((num_batches, 3), dtype=pos.dtype)
    out_batch = jnp.arange(num_batches, dtype=jnp.int32)
    return out_x, out_pos, out_batch


def _reference(x, pos, batch, params, num_batches):
    """Pure-JAX f32 reference mirroring the PyTorch forward (eval-mode BN)."""
    h = jnp.concatenate([x, pos], axis=1).astype(jnp.float32)
    for (w, b, gamma, beta, rmean, rvar, eps) in params:
        h = jnp.maximum(h @ w + b, 0.0)
        h = (h - rmean) / jnp.sqrt(rvar + eps) * gamma + beta
    out = jnp.full((num_batches, h.shape[1]), -jnp.inf, dtype=jnp.float32)
    out = out.at[batch].max(h)                       # global_max_pool
    return out


if __name__ == "__main__":
    key = jax.random.PRNGKey(0)
    B = 2
    N = 24                     # total points (12 per batch element, sorted)
    C_IN = 4                   # input feature channels
    channels = [C_IN + 3, 32, 64, 128]   # MLP([in+3, 32, 64, 128])

    keys = jax.random.split(key, 2 + 5 * (len(channels) - 1))
    x = jax.random.normal(keys[0], (N, C_IN), dtype=jnp.float32)
    pos = jax.random.normal(keys[1], (N, 3), dtype=jnp.float32)
    batch = jnp.repeat(jnp.arange(B, dtype=jnp.int32), N // B)

    params = []
    kidx = 2
    for cin, cout in zip(channels[:-1], channels[1:]):
        w = jax.random.normal(keys[kidx], (cin, cout), jnp.float32) / jnp.sqrt(cin)
        b = 0.1 * jax.random.normal(keys[kidx + 1], (cout,), jnp.float32)
        gamma = 1.0 + 0.1 * jax.random.normal(keys[kidx + 2], (cout,), jnp.float32)
        beta = 0.1 * jax.random.normal(keys[kidx + 3], (cout,), jnp.float32)
        rmean = 0.05 * jax.random.normal(keys[kidx + 4], (cout,), jnp.float32)
        rvar = jnp.ones((cout,), jnp.float32)
        params.append((w, b, gamma, beta, rmean, rvar, 1e-5))
        kidx += 5

    ref = _reference(x, pos, batch, params, B)

    # Small tile: exercises multi-tile accumulation, a tile that spans two
    # batches (rows 8..15) and the dual-core split (core 1 gets only batch 1).
    out_x, out_pos, out_batch = global_sa_forward(x, pos, batch, params, B,
                                                  tile_n=8)
    jax.block_until_ready(out_x)
    # Default (large) tile path: whole point cloud in one tile per core.
    out_x2, _, _ = global_sa_forward(x, pos, batch, params, B)
    jax.block_until_ready(out_x2)

    assert out_x.shape == (B, channels[-1]) and out_x.dtype == jnp.float32
    assert out_pos.shape == (B, 3)
    assert out_batch.shape == (B,)
    # bf16 matmul operands -> slightly looser tolerance than the f32 reference.
    assert jnp.allclose(out_x, ref, atol=5e-2, rtol=5e-2), "mismatch (tiled)"
    assert jnp.allclose(out_x2, ref, atol=5e-2, rtol=5e-2), "mismatch (default)"

    print("KERNEL_OK")
</pallas_src>

<mosaic_0001>
module attributes {stable_mosaic.version = 11 : i64} {
  func.func @_global_sa_kernel(%arg0: i32, %arg1: i32, %arg2: memref<3xi32, #tpu.memory_space<smem>>, %arg3: memref<8x8xf32, #tpu.memory_space<vmem>>, %arg4: memref<8x32xbf16, #tpu.memory_space<vmem>>, %arg5: memref<1x32xf32, #tpu.memory_space<vmem>>, %arg6: memref<32x64xbf16, #tpu.memory_space<vmem>>, %arg7: memref<1x64xf32, #tpu.memory_space<vmem>>, %arg8: memref<64x128xbf16, #tpu.memory_space<vmem>>, %arg9: memref<1x128xf32, #tpu.memory_space<vmem>>, %arg10: memref<1x128xf32, #tpu.memory_space<vmem>>, %arg11: memref<1x128xf32, #tpu.memory_space<vmem>>, %arg12: memref<1x2x128xf32, #tpu.memory_space<vmem>>, %arg13: memref<2x128xf32, #tpu.memory_space<vmem>>) attributes {dimension_semantics = [#tpu.dimension_semantics<parallel>, #tpu.dimension_semantics<arbitrary>], iteration_bounds = array<i64: 2, 2>, scalar_prefetch = 1 : i64, scratch_operands = 1 : i64, tpu.core_type = #tpu.core_type<tc>, window_params = [{transform_indices = @transform_0, window_bounds = array<i64: 8, 8>}, {pipeline_mode = #tpu.pipeline_mode<synchronous>, transform_indices = @transform_1, window_bounds = array<i64: 8, 32>}, {pipeline_mode = #tpu.pipeline_mode<synchronous>, transform_indices = @transform_2, window_bounds = array<i64: 1, 32>}, {pipeline_mode = #tpu.pipeline_mode<synchronous>, transform_indices = @transform_3, window_bounds = array<i64: 32, 64>}, {pipeline_mode = #tpu.pipeline_mode<synchronous>, transform_indices = @transform_4, window_bounds = array<i64: 1, 64>}, {pipeline_mode = #tpu.pipeline_mode<synchronous>, transform_indices = @transform_5, window_bounds = array<i64: 64, 128>}, {pipeline_mode = #tpu.pipeline_mode<synchronous>, transform_indices = @transform_6, window_bounds = array<i64: 1, 128>}, {pipeline_mode = #tpu.pipeline_mode<synchronous>, transform_indices = @transform_7, window_bounds = array<i64: 1, 128>}, {pipeline_mode = #tpu.pipeline_mode<synchronous>, transform_indices = @transform_8, window_bounds = array<i64: 1, 128>}, {transform_indices = @transform_9, window_bounds = array<i64: 1, 2, 128>}]} {
    %c0_i32 = arith.constant 0 : i32
    %0 = arith.cmpi eq, %arg1, %c0_i32 : i32
    %1 = arith.extui %0 : i1 to i32
    %c0_i32_0 = arith.constant 0 : i32
    %2 = arith.cmpi ne, %1, %c0_i32_0 : i32
    scf.if %2 {
      %cst_34 = arith.constant 0xFF800000 : f32
      %73 = vector.broadcast %cst_34 : f32 to vector<2x128xf32>
      %c0_35 = arith.constant 0 : index
      %c0_36 = arith.constant 0 : index
      %74 = vector.load %arg13[%c0_35, %c0_36] : memref<2x128xf32, #tpu.memory_space<vmem>>, vector<2x128xf32>
      tpu.vector_store %arg13[%c0_35, %c0_36], %73 {strides = array<i32>} : memref<2x128xf32, #tpu.memory_space<vmem>>, vector<2x128xf32>,
    } else {
    }
    %c0 = arith.constant 0 : index
    %c0_1 = arith.constant 0 : index
    %3 = vector.load %arg3[%c0, %c0_1] : memref<8x8xf32, #tpu.memory_space<vmem>>, vector<8x8xf32>
    %4 = arith.truncf %3 : vector<8x8xf32> to vector<8x8xbf16>
    %c0_2 = arith.constant 0 : index
    %c0_3 = arith.constant 0 : index
    %5 = vector.load %arg4[%c0_2, %c0_3] : memref<8x32xbf16, #tpu.memory_space<vmem>>, vector<8x32xbf16>
    %cst = arith.constant dense<0.000000e+00> : vector<8x32xf32>
    %6 = tpu.matmul %4, %5, %cst {dimension_numbers = #tpu.dot_dimension_numbers<[1], [0], [0], [1], [0, 0, 1, 1], [], []>} : vector<8x8xbf16>, vector<8x32xbf16>, vector<8x32xf32> -> vector<8x32xf32>
    %c0_4 = arith.constant 0 : index
    %c0_5 = arith.constant 0 : index
    %7 = vector.load %arg5[%c0_4, %c0_5] : memref<1x32xf32, #tpu.memory_space<vmem>>, vector<1x32xf32>
    %8 = vector.broadcast %7 : vector<1x32xf32> to vector<8x32xf32>
    %9 = arith.addf %6, %8 : vector<8x32xf32>
    %cst_6 = arith.constant 0.000000e+00 : f32
    %10 = vector.broadcast %cst_6 : f32 to vector<8x32xf32>
    %11 = arith.maximumf %9, %10 : vector<8x32xf32>
    %12 = arith.truncf %11 : vector<8x32xf32> to vector<8x32xbf16>
    %c0_7 = arith.constant 0 : index
    %c0_8 = arith.constant 0 : index
    %13 = vector.load %arg6[%c0_7, %c0_8] : memref<32x64xbf16, #tpu.memory_space<vmem>>, vector<32x64xbf16>
    %cst_9 = arith.constant dense<0.000000e+00> : vector<8x64xf32>
    %14 = tpu.matmul %12, %13, %cst_9 {dimension_numbers = #tpu.dot_dimension_numbers<[1], [0], [0], [1], [0, 0, 1, 1], [], []>} : vector<8x32xbf16>, vector<32x64xbf16>, vector<8x64xf32> -> vector<8x64xf32>
    %c0_10 = arith.constant 0 : index
    %c0_11 = arith.constant 0 : index
    %15 = vector.load %arg7[%c0_10, %c0_11] : memref<1x64xf32, #tpu.memory_space<vmem>>, vector<1x64xf32>
    %16 = vector.broadcast %15 : vector<1x64xf32> to vector<8x64xf32>
    %17 = arith.addf %14, %16 : vector<8x64xf32>
    %cst_12 = arith.constant 0.000000e+00 : f32
    %18 = vector.broadcast %cst_12 : f32 to vector<8x64xf32>
    %19 = arith.maximumf %17, %18 : vector<8x64xf32>
    %20 = arith.truncf %19 : vector<8x64xf32> to vector<8x64xbf16>
    %c0_13 = arith.constant 0 : index
    %c0_14 = arith.constant 0 : index
    %21 = vector.load %arg8[%c0_13, %c0_14] : memref<64x128xbf16, #tpu.memory_space<vmem>>, vector<64x128xbf16>
    %cst_15 = arith.constant dense<0.000000e+00> : vector<8x128xf32>
    %22 = tpu.matmul %20, %21, %cst_15 {dimension_numbers = #tpu.dot_dimension_numbers<[1], [0], [0], [1], [0, 0, 1, 1], [], []>} : vector<8x64xbf16>, vector<64x128xbf16>, vector<8x128xf32> -> vector<8x128xf32>
    %c0_16 = arith.constant 0 : index
    %c0_17 = arith.constant 0 : index
    %23 = vector.load %arg9[%c0_16, %c0_17] : memref<1x128xf32, #tpu.memory_space<vmem>>, vector<1x128xf32>
    %24 = vector.broadcast %23 : vector<1x128xf32> to vector<8x128xf32>
    %25 = arith.addf %22, %24 : vector<8x128xf32>
    %cst_18 = arith.constant 0.000000e+00 : f32
    %26 = vector.broadcast %cst_18 : f32 to vector<8x128xf32>
    %27 = arith.maximumf %25, %26 : vector<8x128xf32>
    %c0_19 = arith.constant 0 : index
    %c0_20 = arith.constant 0 : index
    %28 = vector.load %arg10[%c0_19, %c0_20] : memref<1x128xf32, #tpu.memory_space<vmem>>, vector<1x128xf32>
    %29 = vector.broadcast %28 : vector<1x128xf32> to vector<8x128xf32>
    %30 = arith.mulf %27, %29 : vector<8x128xf32>
    %c0_21 = arith.constant 0 : index
    %c0_22 = arith.constant 0 : index
    %31 = vector.load %arg11[%c0_21, %c0_22] : memref<1x128xf32, #tpu.memory_space<vmem>>, vector<1x128xf32>
    %32 = vector.broadcast %31 : vector<1x128xf32> to vector<8x128xf32>
    %33 = arith.addf %30, %32 : vector<8x128xf32>
    %c2_i32 = arith.constant 2 : i32
    %34 = arith.muli %arg0, %c2_i32 : i32
    %35 = arith.addi %34, %arg1 : i32
    %c8_i32 = arith.constant 8 : i32
    %36 = arith.muli %35, %c8_i32 : i32
    %37 = tpu.iota {dimensions = array<i32: 0>} : vector<8x1xi32>
    %38 = vector.broadcast %36 : i32 to vector<8x1xi32>
    %39 = arith.addi %38, %37 : vector<8x1xi32>
    %c0_23 = arith.constant 0 : index
    %40 = memref.load %arg2[%c0_23] : memref<3xi32, #tpu.memory_space<smem>>
    %c1 = arith.constant 1 : index
    %41 = memref.load %arg2[%c1] : memref<3xi32, #tpu.memory_space<smem>>
    %42 = vector.broadcast %40 : i32 to vector<8x1xi32>
    %43 = arith.cmpi sge, %39, %42 : vector<8x1xi32>
    %44 = vector.broadcast %41 : i32 to vector<8x1xi32>
    %45 = arith.cmpi slt, %39, %44 : vector<8x1xi32>
    %46 = arith.andi %43, %45 : vector<8x1xi1>
    %cst_24 = arith.constant 0xFF800000 : f32
    %47 = vector.shape_cast %46 : vector<8x1xi1> to vector<8x1xi1>
    %48 = vector.broadcast %47 : vector<8x1xi1> to vector<8x128xi1>
    %49 = vector.broadcast %cst_24 : f32 to vector<8x128xf32>
    %50 = arith.select %48, %33, %49 : vector<8x128xi1>, vector<8x128xf32>
    %cst_25 = arith.constant dense<0xFF800000> : vector<128xf32>
    %51 = vector.multi_reduction <maximumf>, %50, %cst_25 [0] : vector<8x128xf32> to vector<128xf32>
    %52 = vector.shape_cast %51 : vector<128xf32> to vector<1x128xf32>
    %c1_26 = arith.constant 1 : index
    %53 = memref.load %arg2[%c1_26] : memref<3xi32, #tpu.memory_space<smem>>
    %c2 = arith.constant 2 : index
    %54 = memref.load %arg2[%c2] : memref<3xi32, #tpu.memory_space<smem>>
    %55 = vector.broadcast %53 : i32 to vector<8x1xi32>
    %56 = arith.cmpi sge, %39, %55 : vector<8x1xi32>
    %57 = vector.broadcast %54 : i32 to vector<8x1xi32>
    %58 = arith.cmpi slt, %39, %57 : vector<8x1xi32>
    %59 = arith.andi %56, %58 : vector<8x1xi1>
    %cst_27 = arith.constant 0xFF800000 : f32
    %60 = vector.shape_cast %59 : vector<8x1xi1> to vector<8x1xi1>
    %61 = vector.broadcast %60 : vector<8x1xi1> to vector<8x128xi1>
    %62 = vector.broadcast %cst_27 : f32 to vector<8x128xf32>
    %63 = arith.select %61, %33, %62 : vector<8x128xi1>, vector<8x128xf32>
    %cst_28 = arith.constant dense<0xFF800000> : vector<128xf32>
    %64 = vector.multi_reduction <maximumf>, %63, %cst_28 [0] : vector<8x128xf32> to vector<128xf32>
    %65 = vector.shape_cast %64 : vector<128xf32> to vector<1x128xf32>
    %66 = tpu.concatenate %52, %65 in 0 : vector<1x128xf32>, vector<1x128xf32> -> vector<2x128xf32>
    %c0_29 = arith.constant 0 : index
    %c0_30 = arith.constant 0 : index
    %67 = vector.load %arg13[%c0_29, %c0_30] : memref<2x128xf32, #tpu.memory_space<vmem>>, vector<2x128xf32>
    %68 = arith.maximumf %67, %66 : vector<2x128xf32>
    %c0_31 = arith.constant 0 : index
    %c0_32 = arith.constant 0 : index
    %69 = vector.load %arg13[%c0_31, %c0_32] : memref<2x128xf32, #tpu.memory_space<vmem>>, vector<2x128xf32>
    tpu.vector_store %arg13[%c0_31, %c0_32], %68 {strides = array<i32>} : memref<2x128xf32, #tpu.memory_space<vmem>>, vector<2x128xf32>,
    %c1_i32 = arith.constant 1 : i32
    %70 = arith.cmpi eq, %arg1, %c1_i32 : i32
    %71 = arith.extui %70 : i1 to i32
    %c0_i32_33 = arith.constant 0 : i32
    %72 = arith.cmpi ne, %71, %c0_i32_33 : i32
    scf.if %72 {
      %c0_34 = arith.constant 0 : index
      %c0_35 = arith.constant 0 : index
      %73 = vector.load %arg13[%c0_34, %c0_35] : memref<2x128xf32, #tpu.memory_space<vmem>>, vector<2x128xf32>
      %c0_36 = arith.constant 0 : index
      %c0_37 = arith.constant 0 : index
      %c0_38 = arith.constant 0 : index
      %74 = vector.load %arg12[%c0_36, %c0_37, %c0_38] : memref<1x2x128xf32, #tpu.memory_space<vmem>>, vector<1x2x128xf32>
      %75 = vector.shape_cast %74 : vector<1x2x128xf32> to vector<2x128xf32>
      %76 = vector.shape_cast %73 : vector<2x128xf32> to vector<1x2x128xf32>
      tpu.vector_store %arg12[%c0_36, %c0_37, %c0_38], %76 {strides = array<i32>} : memref<1x2x128xf32, #tpu.memory_space<vmem>>, vector<1x2x128xf32>,
    } else {
    }
    return
  }
  func.func @transform_0(%arg0: i32, %arg1: i32, %arg2: memref<3xi32, #tpu.memory_space<smem>>) -> (i32, i32) {
    %c2_i32 = arith.constant 2 : i32
    %0 = arith.muli %arg0, %c2_i32 : i32
    %1 = arith.addi %0, %arg1 : i32
    %c0_i32 = arith.constant 0 : i32
    %c0_i32_0 = arith.constant 0 : i32
    return %1, %c0_i32 : i32, i32
  }
  func.func @transform_1(%arg0: i32, %arg1: i32, %arg2: memref<3xi32, #tpu.memory_space<smem>>) -> (i32, i32) {
    %c0_i32 = arith.constant 0 : i32
    %c0_i32_0 = arith.constant 0 : i32
    %c0_i32_1 = arith.constant 0 : i32
    return %c0_i32, %c0_i32_0 : i32, i32
  }
  func.func @transform_2(%arg0: i32, %arg1: i32, %arg2: memref<3xi32, #tpu.memory_space<smem>>) -> (i32, i32) {
    %c0_i32 = arith.constant 0 : i32
    %c0_i32_0 = arith.constant 0 : i32
    %c0_i32_1 = arith.constant 0 : i32
    return %c0_i32, %c0_i32_0 : i32, i32
  }
  func.func @transform_3(%arg0: i32, %arg1: i32, %arg2: memref<3xi32, #tpu.memory_space<smem>>) -> (i32, i32) {
    %c0_i32 = arith.constant 0 : i32
    %c0_i32_0 = arith.constant 0 : i32
    %c0_i32_1 = arith.constant 0 : i32
    return %c0_i32, %c0_i32_0 : i32, i32
  }
  func.func @transform_4(%arg0: i32, %arg1: i32, %arg2: memref<3xi32, #tpu.memory_space<smem>>) -> (i32, i32) {
    %c0_i32 = arith.constant 0 : i32
    %c0_i32_0 = arith.constant 0 : i32
    %c0_i32_1 = arith.constant 0 : i32
    return %c0_i32, %c0_i32_0 : i32, i32
  }
  func.func @transform_5(%arg0: i32, %arg1: i32, %arg2: memref<3xi32, #tpu.memory_space<smem>>) -> (i32, i32) {
    %c0_i32 = arith.constant 0 : i32
    %c0_i32_0 = arith.constant 0 : i32
    %c0_i32_1 = arith.constant 0 : i32
    return %c0_i32, %c0_i32_0 : i32, i32
  }
  func.func @transform_6(%arg0: i32, %arg1: i32, %arg2: memref<3xi32, #tpu.memory_space<smem>>) -> (i32, i32) {
    %c0_i32 = arith.constant 0 : i32
    %c0_i32_0 = arith.constant 0 : i32
    %c0_i32_1 = arith.constant 0 : i32
    return %c0_i32, %c0_i32_0 : i32, i32
  }
  func.func @transform_7(%arg0: i32, %arg1: i32, %arg2: memref<3xi32, #tpu.memory_space<smem>>) -> (i32, i32) {
    %c0_i32 = arith.constant 0 : i32
    %c0_i32_0 = arith.constant 0 : i32
    %c0_i32_1 = arith.constant 0 : i32
    return %c0_i32, %c0_i32_0 : i32, i32
  }
  func.func @transform_8(%arg0: i32, %arg1: i32, %arg2: memref<3xi32, #tpu.memory_space<smem>>) -> (i32, i32) {
    %c0_i32 = arith.constant 0 : i32
    %c0_i32_0 = arith.constant 0 : i32
    %c0_i32_1 = arith.constant 0 : i32
    return %c0_i32, %c0_i32_0 : i32, i32
  }
  func.func @transform_9(%arg0: i32, %arg1: i32, %arg2: memref<3xi32, #tpu.memory_space<smem>>) -> (i32, i32, i32) {
    %c0_i32 = arith.constant 0 : i32
    %c0_i32_0 = arith.constant 0 : i32
    %c0_i32_1 = arith.constant 0 : i32
    return %arg0, %c0_i32, %c0_i32_0 : i32, i32, i32
  }
}

</mosaic_0001>

<llo_original>
// kernel: tpu_custom_call.1
$region0: #{tpu_custom_call.1}
  #allocation0 [shape = 'u32[]', space=smem, size = 0x4, offset = 0x4, fixed_abs, tag = 'smem constant byte address 0x4 - core index']
  #allocation1 [shape = 'u32[144,128]{1,0:T(1,128)}', space=vmem, size = 0x12000, scoped, tag = 'internal scratch']
  #allocation2 [shape = 'f32[2,128]{1,0:T(2,128)}', space=vmem, size = 0x400, scoped, tag = 'scratch operand']
  #allocation3 [shape = 's32[1]{0}', space=sflag, size = 0x4, scoped, tag = 'scoped memory for tpu_custom_call.1']
  #allocation4 [shape = 'u8[512]{0}', space=smem, size = 0x200, scoped, tag = 'prefetched SMEM operand 0']
  %s0 = inlined_call_operand.vmem [shape: s32[3], index: 0, kind: input, shape index: {}]
  %s1 = inlined_call_operand.vmem [shape: f32[32,8], index: 1, kind: input, shape index: {}]
  %s2 = inlined_call_operand.hbm [shape: bf16[8,32], index: 2, kind: input, shape index: {}]
  %s3 = inlined_call_operand.vmem [shape: f32[1,32], index: 3, kind: input, shape index: {}]
  %s4 = inlined_call_operand.vmem [shape: bf16[32,64], index: 4, kind: input, shape index: {}]
  %s5 = inlined_call_operand.hbm [shape: f32[1,64], index: 5, kind: input, shape index: {}]
  %s6 = inlined_call_operand.vmem [shape: bf16[64,128], index: 6, kind: input, shape index: {}]
  %s7 = inlined_call_operand.vmem [shape: f32[1,128], index: 7, kind: input, shape index: {}]
  %s8 = inlined_call_operand.vmem [shape: f32[1,128], index: 8, kind: input, shape index: {}]
  %s9 = inlined_call_operand.vmem [shape: f32[1,128], index: 9, kind: input, shape index: {}]
  %s10 = inlined_call_operand.hbm [shape: f32[2,2,128], index: 10, kind: output, shape index: {}]
  %s11 = sld [smem:[#allocation0]]
  $region85: #{tpu_custom_call.1} parent=0
    _
  %s13 = ssub.s32 1, %s11
  %s14 = scalar_select 0, %s13, %s11
  %s15 = sshll.u32 %s0, 4
  %s16 = int_to_ptr.vmem [resolvable:$true] %s15
  %18 = dma.vmem_to_smem %s16, 16, [#allocation4], [#allocation3]
  %19 = dma.done [#allocation3], 16
  %20 = sfence
  $region1: #{tpu_custom_call.1} parent=0
    #allocation5 [shape = 'u8[2048]{0}', space=vmem, size = 0x800, scoped, tag = 'input window, operand 2, single buffered']
    #allocation6 [shape = 's32[2]{0}', space=sflag, size = 0x8, scoped, tag = 'scoped memory for tpu_custom_call.1']
    #allocation7 [shape = 's32[2]{0}', space=sflag, size = 0x8, scoped, tag = 'scoped memory for tpu_custom_call.1']
    #allocation8 [shape = 'u8[512]{0}', space=vmem, size = 0x400, scoped, tag = 'input window, operand 5, single buffered']
    #allocation9 [shape = 's32[1]{0}', space=sflag, size = 0x4, scoped, tag = 'scoped memory for tpu_custom_call.1']
    #allocation10 [shape = 'u8[2048]{0}', space=vmem, size = 0x800, scoped, tag = 'output window, operand 0']
    %21 = vsyncpa [#allocation6], 0
    %22 = vsyncpa [#allocation9], 0
    %23 = vsyncpa [#allocation7], 0
    %s24 = scalar_lea.sflag [#allocation7], 1
    %25 = vsyncpa %s24, 0
    loop: start=0, step=1, limit=6
    $region2: #{tpu_custom_call.1} parent=1 // loop_pre_header
      _
    $region3: #{tpu_custom_call.1} parent=1 // loop_header
      %s27 = sphi 0, %s31
      %p28 = scmp.ge.s32.totalorder %s27, 6
      %s34 = sphi 0, %s46
      %s35 = sphi 0, %s42
      %s36 = sphi 0, %s34
      %s37 = sphi 0, %s35
      %s38 = sphi 0, %s36
      %s39 = sphi 0, %s37
      %s53 = sphi 0, %s55
      %s56 = sphi 0, %s53
      %s57 = sphi 0, %s56
      %s73 = sphi 0, %s57
      %s77 = sphi 0, %s77
      %s79 = sphi 0, %s77
      %s80 = sphi 0, %s79
      %s94 = sphi 0, %s80
      %s98 = sphi 0, %s98
      %s100 = sphi 0, %s98
      %s101 = sphi 0, %s100
      %s115 = sphi 0, %s101
      %s119 = sphi 0, %s119
      %s121 = sphi 0, %s119
      %s122 = sphi 0, %s121
      %s136 = sphi 0, %s122
      %s140 = sphi 0, %s140
      %s142 = sphi 0, %s140
      %s143 = sphi 0, %s142
      %s157 = sphi 0, %s143
      %s161 = sphi 0, %s161
      %s163 = sphi 0, %s161
      %s164 = sphi 0, %s163
      %s178 = sphi 0, %s164
      %s182 = sphi 0, %s182
      %s184 = sphi 0, %s182
      %s185 = sphi 0, %s184
      %s199 = sphi 0, %s185
      %s203 = sphi 0, %s203
      %s205 = sphi 0, %s203
      %s206 = sphi 0, %s205
      %s220 = sphi 0, %s206
      %s224 = sphi 0, %s224
      %s226 = sphi 0, %s224
      %s227 = sphi 0, %s226
      %s241 = sphi 0, %s227
      %s247 = sphi 0, %s249
      %s250 = sphi 0, %s247
      %s251 = sphi 0, %s250
      %s267 = sphi 0, %s251
    $region4: #{tpu_custom_call.1} parent=1 // loop_header_branch
      %30 = sbr.rel (%p28) target = $region8
    $region5: #{tpu_custom_call.1} parent=1 // loop_body
      %s32 = ssub.s32 %s27, 1
      %s33 = ssub.s32 %s27, 2
      %s40 = sadd.s32 1, %s35
      %p41 = scmp.ge.s32.totalorder %s40, 2
      %s42 = scalar_select %p41, 0, %s40
      %s43 = sadd.s32 1, %s34
      %s44 = scalar_select %p41, %s43, %s34
      %p45 = scmp.ge.s32.totalorder %s44, 2
      %s46 = scalar_select %p45, 0, %s44
      %s47 = smul.u32 %s34, 2
      %s48 = sadd.s32 %s47, %s35
      %s49 = smul.u32 %s46, 2
      %s50 = sadd.s32 %s49, %s42
      %s51 = ssub.s32 %s48, %s50
      %p52 = scmp.eq.s32.totalorder %s51, 0
      %s54 = sadd.s32 %s53, 1
      %s55 = scalar_select %p52, %s53, %s54
      %p58 = pneg %p52
      %p59 = scmp.eq.s32.totalorder %s27, 3
      %p60 = por %p58, %p59
      %p61 = scmp.ne.s32.totalorder %s53, %s56
      %p62 = scmp.eq.s32.totalorder %s27, 0
      %p63 = por %p61, %p62
      %p64 = scmp.ne.s32.totalorder %s53, %s56
      %p65 = scmp.eq.s32.totalorder %s32, 3
      %p66 = por %p64, %p65
      %p67 = scmp.ne.s32.totalorder %s56, %s57
      %p68 = scmp.eq.s32.totalorder %s32, 0
      %p69 = por %p67, %p68
      %p70 = scmp.ne.s32.totalorder %s56, %s57
      %p71 = scmp.eq.s32.totalorder %s33, 3
      %p72 = por %p70, %p71
      %p74 = scmp.ne.s32.totalorder %s57, %s73
      %p75 = scmp.eq.s32.totalorder %s33, 0
      %p76 = por %p74, %p75
      %s78 = sadd.s32 %s77, 1
      %p81 = scmp.eq.s32.totalorder %s27, 3
      %p82 = scmp.ne.s32.totalorder %s77, %s79
      %p83 = scmp.eq.s32.totalorder %s27, 0
      %p84 = por %p82, %p83
      %p85 = scmp.ne.s32.totalorder %s77, %s79
      %p86 = scmp.eq.s32.totalorder %s32, 3
      %p87 = por %p85, %p86
      %p88 = scmp.ne.s32.totalorder %s79, %s80
      %p89 = scmp.eq.s32.totalorder %s32, 0
      %p90 = por %p88, %p89
      %p91 = scmp.ne.s32.totalorder %s79, %s80
      %p92 = scmp.eq.s32.totalorder %s33, 3
      %p93 = por %p91, %p92
      %p95 = scmp.ne.s32.totalorder %s80, %s94
      %p96 = scmp.eq.s32.totalorder %s33, 0
      %p97 = por %p95, %p96
      %s99 = sadd.s32 %s98, 1
      %p102 = scmp.eq.s32.totalorder %s27, 3
      %p103 = scmp.ne.s32.totalorder %s98, %s100
      %p104 = scmp.eq.s32.totalorder %s27, 0
      %p105 = por %p103, %p104
      %p106 = scmp.ne.s32.totalorder %s98, %s100
      %p107 = scmp.eq.s32.totalorder %s32, 3
      %p108 = por %p106, %p107
      %p109 = scmp.ne.s32.totalorder %s100, %s101
      %p110 = scmp.eq.s32.totalorder %s32, 0
      %p111 = por %p109, %p110
      %p112 = scmp.ne.s32.totalorder %s100, %s101
      %p113 = scmp.eq.s32.totalorder %s33, 3
      %p114 = por %p112, %p113
      %p116 = scmp.ne.s32.totalorder %s101, %s115
      %p117 = scmp.eq.s32.totalorder %s33, 0
      %p118 = por %p116, %p117
      %s120 = sadd.s32 %s119, 1
      %p123 = scmp.eq.s32.totalorder %s27, 3
      %p124 = scmp.ne.s32.totalorder %s119, %s121
      %p125 = scmp.eq.s32.totalorder %s27, 0
      %p126 = por %p124, %p125
      %p127 = scmp.ne.s32.totalorder %s119, %s121
      %p128 = scmp.eq.s32.totalorder %s32, 3
      %p129 = por %p127, %p128
      %p130 = scmp.ne.s32.totalorder %s121, %s122
      %p131 = scmp.eq.s32.totalorder %s32, 0
      %p132 = por %p130, %p131
      %p133 = scmp.ne.s32.totalorder %s121, %s122
      %p134 = scmp.eq.s32.totalorder %s33, 3
      %p135 = por %p133, %p134
      %p137 = scmp.ne.s32.totalorder %s122, %s136
      %p138 = scmp.eq.s32.totalorder %s33, 0
      %p139 = por %p137, %p138
      %s141 = sadd.s32 %s140, 1
      %p144 = scmp.eq.s32.totalorder %s27, 3
      %p145 = scmp.ne.s32.totalorder %s140, %s142
      %p146 = scmp.eq.s32.totalorder %s27, 0
      %p147 = por %p145, %p146
      %p148 = scmp.ne.s32.totalorder %s140, %s142
      %p149 = scmp.eq.s32.totalorder %s32, 3
      %p150 = por %p148, %p149
      %p151 = scmp.ne.s32.totalorder %s142, %s143
      %p152 = scmp.eq.s32.totalorder %s32, 0
      %p153 = por %p151, %p152
      %p154 = scmp.ne.s32.totalorder %s142, %s143
      %p155 = scmp.eq.s32.totalorder %s33, 3
      %p156 = por %p154, %p155
      %p158 = scmp.ne.s32.totalorder %s143, %s157
      %p159 = scmp.eq.s32.totalorder %s33, 0
      %p160 = por %p158, %p159
      %s162 = sadd.s32 %s161, 1
      %p165 = scmp.eq.s32.totalorder %s27, 3
      %p166 = scmp.ne.s32.totalorder %s161, %s163
      %p167 = scmp.eq.s32.totalorder %s27, 0
      %p168 = por %p166, %p167
      %p169 = scmp.ne.s32.totalorder %s161, %s163
      %p170 = scmp.eq.s32.totalorder %s32, 3
      %p171 = por %p169, %p170
      %p172 = scmp.ne.s32.totalorder %s163, %s164
      %p173 = scmp.eq.s32.totalorder %s32, 0
      %p174 = por %p172, %p173
      %p175 = scmp.ne.s32.totalorder %s163, %s164
      %p176 = scmp.eq.s32.totalorder %s33, 3
      %p177 = por %p175, %p176
      %p179 = scmp.ne.s32.totalorder %s164, %s178
      %p180 = scmp.eq.s32.totalorder %s33, 0
      %p181 = por %p179, %p180
      %s183 = sadd.s32 %s182, 1
      %p186 = scmp.eq.s32.totalorder %s27, 3
      %p187 = scmp.ne.s32.totalorder %s182, %s184
      %p188 = scmp.eq.s32.totalorder %s27, 0
      %p189 = por %p187, %p188
      %p190 = scmp.ne.s32.totalorder %s182, %s184
      %p191 = scmp.eq.s32.totalorder %s32, 3
      %p192 = por %p190, %p191
      %p193 = scmp.ne.s32.totalorder %s184, %s185
      %p194 = scmp.eq.s32.totalorder %s32, 0
      %p195 = por %p193, %p194
      %p196 = scmp.ne.s32.totalorder %s184, %s185
      %p197 = scmp.eq.s32.totalorder %s33, 3
      %p198 = por %p196, %p197
      %p200 = scmp.ne.s32.totalorder %s185, %s199
      %p201 = scmp.eq.s32.totalorder %s33, 0
      %p202 = por %p200, %p201
      %s204 = sadd.s32 %s203, 1
      %p207 = scmp.eq.s32.totalorder %s27, 3
      %p208 = scmp.ne.s32.totalorder %s203, %s205
      %p209 = scmp.eq.s32.totalorder %s27, 0
      %p210 = por %p208, %p209
      %p211 = scmp.ne.s32.totalorder %s203, %s205
      %p212 = scmp.eq.s32.totalorder %s32, 3
      %p213 = por %p211, %p212
      %p214 = scmp.ne.s32.totalorder %s205, %s206
      %p215 = scmp.eq.s32.totalorder %s32, 0
      %p216 = por %p214, %p215
      %p217 = scmp.ne.s32.totalorder %s205, %s206
      %p218 = scmp.eq.s32.totalorder %s33, 3
      %p219 = por %p217, %p218
      %p221 = scmp.ne.s32.totalorder %s206, %s220
      %p222 = scmp.eq.s32.totalorder %s33, 0
      %p223 = por %p221, %p222
      %s225 = sadd.s32 %s224, 1
      %p228 = scmp.eq.s32.totalorder %s27, 3
      %p229 = scmp.ne.s32.totalorder %s224, %s226
      %p230 = scmp.eq.s32.totalorder %s27, 0
      %p231 = por %p229, %p230
      %p232 = scmp.ne.s32.totalorder %s224, %s226
      %p233 = scmp.eq.s32.totalorder %s32, 3
      %p234 = por %p232, %p233
      %p235 = scmp.ne.s32.totalorder %s226, %s227
      %p236 = scmp.eq.s32.totalorder %s32, 0
      %p237 = por %p235, %p236
      %p238 = scmp.ne.s32.totalorder %s226, %s227
      %p239 = scmp.eq.s32.totalorder %s33, 3
      %p240 = por %p238, %p239
      %p242 = scmp.ne.s32.totalorder %s227, %s241
      %p243 = scmp.eq.s32.totalorder %s33, 0
      %p244 = por %p242, %p243
      %s245 = ssub.s32 %s34, %s46
      %p246 = scmp.eq.s32.totalorder %s245, 0
      %s248 = sadd.s32 %s247, 1
      %s249 = scalar_select %p246, %s247, %s248
      %p252 = pneg %p246
      %p253 = scmp.eq.s32.totalorder %s27, 3
      %p254 = por %p252, %p253
      %p255 = scmp.ne.s32.totalorder %s247, %s250
      %p256 = scmp.eq.s32.totalorder %s27, 0
      %p257 = por %p255, %p256
      %p258 = scmp.ne.s32.totalorder %s247, %s250
      %p259 = scmp.eq.s32.totalorder %s32, 3
      %p260 = por %p258, %p259
      %p261 = scmp.ne.s32.totalorder %s250, %s251
      %p262 = scmp.eq.s32.totalorder %s32, 0
      %p263 = por %p261, %p262
      %p264 = scmp.ne.s32.totalorder %s250, %s251
      %p265 = scmp.eq.s32.totalorder %s33, 3
      %p266 = por %p264, %p265
      %p268 = scmp.ne.s32.totalorder %s251, %s267
      %p269 = scmp.eq.s32.totalorder %s33, 0
      %p270 = por %p268, %p269
      %p271 = scmp.le.s32.totalorder 1, %s27
      %p272 = scmp.lt.s32.totalorder %s27, 5
      %p273 = pnand %p271, %p272
      %p274 = pneg %p273
      // Predicated region
      $region9: #{tpu_custom_call.1} parent=5 // pred_check
        _
      $region10: #{tpu_custom_call.1} parent=5 // pred_check_branch
        %276 = sbr.rel (%p273) target = $region12
      $region11: #{tpu_custom_call.1} parent=5 // pred_region
        %s277 = ssub.s32 %s27, 1
        // Predicated region
        $region13: #{tpu_custom_call.1} parent=11 // pred_check
          %p278 = pneg %p90
        $region14: #{tpu_custom_call.1} parent=11 // pred_check_branch
          %280 = sbr.rel (%p278) target = $region16
        $region15: #{tpu_custom_call.1} parent=11 // pred_region
          %s282 = ssub.s32 64, 64
          %283 = vsyncadd [#allocation6], %s282
          %s285 = sshll.u32 [#allocation5], 4
          %s286 = int_to_ptr.vmem [resolvable:$true] %s285
          %288 = dma.hbm_to_vmem [thread:$0]  %s2, 64, %s286, [#allocation6]
        $region16: #{tpu_custom_call.1} parent=11 // pred_fallthru
          _
        // Predicated region
        $region17: #{tpu_custom_call.1} parent=11 // pred_check
          %p289 = pneg %p111
        $region18: #{tpu_custom_call.1} parent=11 // pred_check_branch
          %291 = sbr.rel (%p289) target = $region20
        $region19: #{tpu_custom_call.1} parent=11 // pred_region
          _
        $region20: #{tpu_custom_call.1} parent=11 // pred_fallthru
          _
        // Predicated region
        $region21: #{tpu_custom_call.1} parent=11 // pred_check
          %p292 = pneg %p132
        $region22: #{tpu_custom_call.1} parent=11 // pred_check_branch
          %294 = sbr.rel (%p292) target = $region24
        $region23: #{tpu_custom_call.1} parent=11 // pred_region
          _
        $region24: #{tpu_custom_call.1} parent=11 // pred_fallthru
          _
        // Predicated region
        $region25: #{tpu_custom_call.1} parent=11 // pred_check
          %p295 = pneg %p153
        $region26: #{tpu_custom_call.1} parent=11 // pred_check_branch
          %297 = sbr.rel (%p295) target = $region28
        $region27: #{tpu_custom_call.1} parent=11 // pred_region
          %s299 = ssub.s32 16, 16
          %300 = vsyncadd [#allocation9], %s299
          %s302 = sshll.u32 [#allocation8], 4
          %s303 = int_to_ptr.vmem [resolvable:$true] %s302
          %305 = dma.hbm_to_vmem [thread:$0]  %s5, 16, %s303, [#allocation9]
        $region28: #{tpu_custom_call.1} parent=11 // pred_fallthru
          _
        // Predicated region
        $region29: #{tpu_custom_call.1} parent=11 // pred_check
          %p306 = pneg %p174
        $region30: #{tpu_custom_call.1} parent=11 // pred_check_branch
          %308 = sbr.rel (%p306) target = $region32
        $region31: #{tpu_custom_call.1} parent=11 // pred_region
          _
        $region32: #{tpu_custom_call.1} parent=11 // pred_fallthru
          _
        // Predicated region
        $region33: #{tpu_custom_call.1} parent=11 // pred_check
          %p309 = pneg %p195
        $region34: #{tpu_custom_call.1} parent=11 // pred_check_branch
          %311 = sbr.rel (%p309) target = $region36
        $region35: #{tpu_custom_call.1} parent=11 // pred_region
          _
        $region36: #{tpu_custom_call.1} parent=11 // pred_fallthru
          _
        // Predicated region
        $region37: #{tpu_custom_call.1} parent=11 // pred_check
          %p312 = pneg %p216
        $region38: #{tpu_custom_call.1} parent=11 // pred_check_branch
          %314 = sbr.rel (%p312) target = $region40
        $region39: #{tpu_custom_call.1} parent=11 // pred_region
          _
        $region40: #{tpu_custom_call.1} parent=11 // pred_fallthru
          _
        // Predicated region
        $region41: #{tpu_custom_call.1} parent=11 // pred_check
          %p315 = pneg %p237
        $region42: #{tpu_custom_call.1} parent=11 // pred_check_branch
          %317 = sbr.rel (%p315) target = $region44
        $region43: #{tpu_custom_call.1} parent=11 // pred_region
          _
        $region44: #{tpu_custom_call.1} parent=11 // pred_fallthru
          _
      $region12: #{tpu_custom_call.1} parent=5 // pred_fallthru
        _
      %p318 = scmp.lt.s32.totalorder %s27, 4
      // Predicated region
      $region45: #{tpu_custom_call.1} parent=5 // pred_check
        %p319 = pneg %p318
      $region46: #{tpu_custom_call.1} parent=5 // pred_check_branch
        %321 = sbr.rel (%p319) target = $region48
      $region47: #{tpu_custom_call.1} parent=5 // pred_region
        // Predicated region
        $region49: #{tpu_custom_call.1} parent=47 // pred_check
          %p322 = pneg %p63
        $region50: #{tpu_custom_call.1} parent=47 // pred_check_branch
          %324 = sbr.rel (%p322) target = $region52
        $region51: #{tpu_custom_call.1} parent=47 // pred_region
          %s325 = smul.u32 %s34, 2
          %s326 = sadd.s32 %s325, %s35
          %p327 = scmp.lt.s32.totalorder %s326, 3
          %s328 = scalar_select %p327, %s326, 3
          %s329 = smul.addr %s328, 8
          %s330 = scalar_lea.vmem %s1, %s329
          %s331 = smul.u32 %s34, 2
          %s332 = sadd.s32 %s331, %s35
        $region52: #{tpu_custom_call.1} parent=47 // pred_fallthru
          _
      $region48: #{tpu_custom_call.1} parent=5 // pred_fallthru
        _
      %p333 = scmp.le.s32.totalorder 1, %s27
      %p334 = scmp.lt.s32.totalorder %s27, 5
      %p335 = pnand %p333, %p334
      %p336 = pneg %p335
      // Predicated region
      $region53: #{tpu_custom_call.1} parent=5 // pred_check
        _
      $region54: #{tpu_custom_call.1} parent=5 // pred_check_branch
        %338 = sbr.rel (%p335) target = $region56
      $region55: #{tpu_custom_call.1} parent=5 // pred_region
        %s339 = ssub.s32 %s27, 1
        // Predicated region
        $region57: #{tpu_custom_call.1} parent=55 // pred_check
          %p340 = pneg %p90
        $region58: #{tpu_custom_call.1} parent=55 // pred_check_branch
          %342 = sbr.rel (%p340) target = $region60
        $region59: #{tpu_custom_call.1} parent=55 // pred_region
          %343 = dma.done [#allocation6], 64
        $region60: #{tpu_custom_call.1} parent=55 // pred_fallthru
          _
        // Predicated region
        $region61: #{tpu_custom_call.1} parent=55 // pred_check
          %p344 = pneg %p153
        $region62: #{tpu_custom_call.1} parent=55 // pred_check_branch
          %346 = sbr.rel (%p344) target = $region64
        $region63: #{tpu_custom_call.1} parent=55 // pred_region
          %347 = dma.done [#allocation9], 16
        $region64: #{tpu_custom_call.1} parent=55 // pred_fallthru
          _
        %s348 = smul.u32 %s36, 2
        %s349 = sadd.s32 %s348, %s37
        %p350 = scmp.lt.s32.totalorder %s349, 3
        %s351 = scalar_select %p350, %s349, 3
        %s352 = smul.addr %s351, 8
        %s353 = scalar_lea.vmem %s1, %s352
        %p354 = pneg %p69
        %p355 = pneg %p66
        %p356 = pneg %p90
        %p357 = pneg %p87
        %p358 = pneg %p111
        %p359 = pneg %p108
        %p360 = pneg %p132
        %p361 = pneg %p129
        %p362 = pneg %p153
        %p363 = pneg %p150
        %p364 = pneg %p174
        %p365 = pneg %p171
        %p366 = pneg %p195
        %p367 = pneg %p192
        %p368 = pneg %p216
        %p369 = pneg %p213
        %p370 = pneg %p237
        %p371 = pneg %p234
        %p372 = pneg %p263
        %p373 = pneg %p260
        %s374 = sand.u32 %s250, 1
        %s375 = scalar_lea.sflag [#allocation7], %s374
        %s376 = sand.u32 %s250, 1
        %s377 = smul.addr %s376, 2
        %s378 = scalar_lea.vmem [#allocation10], %s377
        %s379 = smul.u32 %s36, 2
        %s380 = sadd.s32 %s379, %s37
        %p381 = scmp.lt.s32.totalorder %s380, 3
        %s382 = scalar_select %p381, %s380, 3
        %s383 = smul.addr %s382, 8
        %s384 = scalar_lea.vmem %s1, %s383
        %s385 = smul.u32 %s36, 2
        %s386 = sadd.s32 %s385, %s37
        %p388 = scmp.eq.s32.totalorder %s37, 0
        // Predicated region
        $region65: #{tpu_custom_call.1} parent=55 // pred_check
          %p389 = pneg %p388
        $region66: #{tpu_custom_call.1} parent=55 // pred_check_branch
          %391 = sbr.rel (%p389) target = $region68
        $region67: #{tpu_custom_call.1} parent=55 // pred_region
          %392 = vst [vmem:[#allocation2] sm:$0x3] -inf
        $region68: #{tpu_custom_call.1} parent=55 // pred_fallthru
          _
        %v393 = vld [vmem:[%s384] sm:$0xff]
        %v394 = vpack.c.bf16 %v393, %v393
        %v395 = vld [vmem:[#allocation5] sm:$0xf]
        %v396 = vld [vmem:[%s3] sm:$0x1]
        %v398 = vlaneseq
        %v399 = vshrl.u32 %v398, 7
        %v400 = vsub.s32 0, %v399
        %v401 = vrot.slane %v396, %v400
        %vm403 = vcmask 64512
        %v405 = vsel %vm403, %v394, 0
        %vm407 = vcmask 1043456
        %v409 = vsel %vm407, %v395, 0
        %411 = vmatprep.subr.bf16.mxu0 0
        %412 = vmatpush1.bf16.msra.mxu0 0
        %413 = vmatprep.subr.bf16.mxu0 0
        %414 = vmatpush1.bf16.msra.mxu0 0
        %415 = vmatprep.subr.bf16.mxu0 0
        %416 = vmatpush1.bf16.msra.mxu0 0
        %417 = vmatprep.subr.bf16.mxu0 0
        %418 = vmatpush1.bf16.msra.mxu0 0
        %419 = vmatprep.subr.bf16.mxu0 0
        %420 = vmatpush1.bf16.msra.mxu0 0
        %421 = vmatprep.subr.bf16.mxu0 0
        %422 = vmatpush1.bf16.msra.mxu0 0
        %423 = vmatprep.subr.bf16.mxu0 0
        %424 = vmatpush1.bf16.msra.mxu0 0
        %425 = vmatprep.subr.bf16.mxu0 0
        %426 = vmatpush1.bf16.msra.mxu0 %v409
        %427 = vmatprep.subr.bf16.mxu0 0
        %428 = vmatpush2.bf16.msra.mxu0 0
        %429 = vmatprep.subr.bf16.mxu0 0
        %430 = vmatpush2.bf16.msra.mxu0 0
        %431 = vmatprep.subr.bf16.mxu0 0
        %432 = vmatpush2.bf16.msra.mxu0 0
        %433 = vmatprep.subr.bf16.mxu0 0
        %434 = vmatpush2.bf16.msra.mxu0 0
        %435 = vmatprep.subr.bf16.mxu0 0
        %436 = vmatpush2.bf16.msra.mxu0 0
        %437 = vmatprep.subr.bf16.mxu0 0
        %438 = vmatpush2.bf16.msra.mxu0 0
        %439 = vmatprep.subr.bf16.mxu0 0
        %440 = vmatpush2.bf16.msra.mxu0 0
        %441 = vmatprep.subr.bf16.mxu0 0
        %442 = vmatpush2.bf16.msra.mxu0 0
        %443 = vmatprep.mubr.bf16.mxu0 0
        %444 = vmatmul.mubr.bf16.gmra.mxu0 %v405
        %v445 = vpop.f32.mrf.mxu0
        %v446 = vadd.f32 %v401, %v445
        %v447 = vpop.f32.mrf.mxu0
        %v448 = vpop.f32.mrf.mxu0
        %v449 = vpop.f32.mrf.mxu0
        %450 = vdwg.mxu0
        %v451 = vmax.f32 %v446, 0.0
        %v452 = vpack.c.bf16 %v451, %v451
        %v453 = vld [vmem:[%s4] sm:$0xf]
        %v454 = vld [vmem:[%s4 + $0x4] sm:$0xf]
        %v455 = vld [vmem:[%s4 + $0x8] sm:$0xf]
        %v456 = vld [vmem:[%s4 + $0xc] sm:$0xf]
        %v457 = vld [vmem:[#allocation8] sm:$0x1]
        %v459 = vlaneseq
        %v460 = vshrl.u32 %v459, 7
        %v461 = vsub.s32 0, %v460
        %v462 = vrot.slane %v457, %v461
        %v468 = vunpack.c.l.b16 %v453
        %v469 = vunpack.c.l.b16 %v454
        %v470 = vunpack.c.l.b16 %v455
        %v471 = vunpack.c.l.b16 %v456
        %v472 = vpack.c.b16 %v469, %v468
        %v473 = vpack.c.b16 %v471, %v470
        %vm476 = vcmask 261120
        %v478 = vsel %vm476, %v452, 0
        %480 = vmatprep.subr.bf16.mxu0 0
        %481 = vmatpush1.bf16.msra.mxu0 0
        %482 = vmatprep.subr.bf16.mxu0 0
        %483 = vmatpush1.bf16.msra.mxu0 0
        %484 = vmatprep.subr.bf16.mxu0 0
        %485 = vmatpush1.bf16.msra.mxu0 0
        %486 = vmatprep.subr.bf16.mxu0 0
        %487 = vmatpush1.bf16.msra.mxu0 0
        %488 = vmatprep.subr.bf16.mxu0 0
        %489 = vmatpush1.bf16.msra.mxu0 0
        %490 = vmatprep.subr.bf16.mxu0 0
        %491 = vmatpush1.bf16.msra.mxu0 0
        %492 = vmatprep.subr.bf16.mxu0 0
        %493 = vmatpush1.bf16.msra.mxu0 %v473
        %494 = vmatprep.subr.bf16.mxu0 0
        %495 = vmatpush1.bf16.msra.mxu0 %v472
        %496 = vmatprep.subr.bf16.mxu0 0
        %497 = vmatpush2.bf16.msra.mxu0 0
        %498 = vmatprep.subr.bf16.mxu0 0
        %499 = vmatpush2.bf16.msra.mxu0 0
        %500 = vmatprep.subr.bf16.mxu0 0
        %501 = vmatpush2.bf16.msra.mxu0 0
        %502 = vmatprep.subr.bf16.mxu0 0
        %503 = vmatpush2.bf16.msra.mxu0 0
        %504 = vmatprep.subr.bf16.mxu0 0
        %505 = vmatpush2.bf16.msra.mxu0 0
        %506 = vmatprep.subr.bf16.mxu0 0
        %507 = vmatpush2.bf16.msra.mxu0 0
        %508 = vmatprep.subr.bf16.mxu0 0
        %509 = vmatpush2.bf16.msra.mxu0 0
        %510 = vmatprep.subr.bf16.mxu0 0
        %511 = vmatpush2.bf16.msra.mxu0 0
        %512 = vmatprep.mubr.bf16.mxu0 0
        %513 = vmatmul.mubr.bf16.gmra.mxu0 %v478
        %v514 = vpop.f32.mrf.mxu0
        %v515 = vadd.f32 %v462, %v514
        %v516 = vpop.f32.mrf.mxu0
        %v517 = vpop.f32.mrf.mxu0
        %v518 = vpop.f32.mrf.mxu0
        %519 = vdwg.mxu0
        %v520 = vmax.f32 %v515, 0.0
        %v521 = vpack.c.bf16 %v520, %v520
        %v522 = vld [vmem:[%s6] sm:$0xf]
        %v523 = vld [vmem:[%s6 + $0x4] sm:$0xf]
        %v524 = vld [vmem:[%s6 + $0x8] sm:$0xf]
        %v525 = vld [vmem:[%s6 + $0xc] sm:$0xf]
        %v526 = vld [vmem:[%s6 + $0x10] sm:$0xf]
        %v527 = vld [vmem:[%s6 + $0x14] sm:$0xf]
        %v528 = vld [vmem:[%s6 + $0x18] sm:$0xf]
        %v529 = vld [vmem:[%s6 + $0x1c] sm:$0xf]
        %v530 = vld [vmem:[%s7] sm:$0x1]
        %v532 = vlaneseq
        %v533 = vshrl.u32 %v532, 7
        %v534 = vsub.s32 0, %v533
        %v535 = vrot.slane %v530, %v534
        %v545 = vunpack.c.l.b16 %v522
        %v546 = vunpack.c.l.b16 %v523
        %v547 = vunpack.c.l.b16 %v524
        %v548 = vunpack.c.l.b16 %v525
        %v549 = vunpack.c.l.b16 %v526
        %v550 = vunpack.c.l.b16 %v527
        %v551 = vunpack.c.l.b16 %v528
        %v552 = vunpack.c.l.b16 %v529
        %v553 = vpack.c.b16 %v546, %v545
        %v554 = vpack.c.b16 %v548, %v547
        %v555 = vpack.c.b16 %v550, %v549
        %v556 = vpack.c.b16 %v552, %v551
        %vm561 = vcmask 523264
        %v563 = vsel %vm561, %v521, 0
        %565 = vmatprep.subr.bf16.mxu0 0
        %566 = vmatpush1.bf16.msra.mxu0 0
        %567 = vmatprep.subr.bf16.mxu0 0
        %568 = vmatpush1.bf16.msra.mxu0 0
        %569 = vmatprep.subr.bf16.mxu0 0
        %570 = vmatpush1.bf16.msra.mxu0 0
        %571 = vmatprep.subr.bf16.mxu0 0
        %572 = vmatpush1.bf16.msra.mxu0 0
        %573 = vmatprep.subr.bf16.mxu0 0
        %574 = vmatpush1.bf16.msra.mxu0 %v556
        %575 = vmatprep.subr.bf16.mxu0 0
        %576 = vmatpush1.bf16.msra.mxu0 %v555
        %577 = vmatprep.subr.bf16.mxu0 0
        %578 = vmatpush1.bf16.msra.mxu0 %v554
        %579 = vmatprep.subr.bf16.mxu0 0
        %580 = vmatpush1.bf16.msra.mxu0 %v553
        %581 = vmatprep.subr.bf16.mxu0 0
        %582 = vmatpush2.bf16.msra.mxu0 0
        %583 = vmatprep.subr.bf16.mxu0 0
        %584 = vmatpush2.bf16.msra.mxu0 0
        %585 = vmatprep.subr.bf16.mxu0 0
        %586 = vmatpush2.bf16.msra.mxu0 0
        %587 = vmatprep.subr.bf16.mxu0 0
        %588 = vmatpush2.bf16.msra.mxu0 0
        %589 = vmatprep.subr.bf16.mxu0 0
        %590 = vmatpush2.bf16.msra.mxu0 0
        %591 = vmatprep.subr.bf16.mxu0 0
        %592 = vmatpush2.bf16.msra.mxu0 0
        %593 = vmatprep.subr.bf16.mxu0 0
        %594 = vmatpush2.bf16.msra.mxu0 0
        %595 = vmatprep.subr.bf16.mxu0 0
        %596 = vmatpush2.bf16.msra.mxu0 0
        %597 = vmatprep.mubr.bf16.mxu0 0
        %598 = vmatmul.mubr.bf16.gmra.mxu0 %v563
        %v599 = vpop.f32.mrf.mxu0
        %v600 = vadd.f32 %v535, %v599
        %v601 = vpop.f32.mrf.mxu0
        %v602 = vpop.f32.mrf.mxu0
        %v603 = vpop.f32.mrf.mxu0
        %604 = vdwg.mxu0
        %v605 = vmax.f32 %v600, 0.0
        %v606 = vld [vmem:[%s8] sm:$0x1]
        %v608 = vlaneseq
        %v609 = vshrl.u32 %v608, 7
        %v610 = vsub.s32 0, %v609
        %v611 = vrot.slane %v606, %v610
        %v613 = vmul.f32 %v605, %v611
        %v614 = vld [vmem:[%s9] sm:$0x1]
        %v616 = vlaneseq
        %v617 = vshrl.u32 %v616, 7
        %v618 = vsub.s32 0, %v617
        %v619 = vrot.slane %v614, %v618
        %v621 = vadd.f32 %v613, %v619
        %s622 = smul.u32 %s36, 2
        %s623 = sadd.s32 %s622, %s37
        %s624 = smul.u32 %s623, 8
        %v625 = vlaneseq
        %v626 = vshrl.u32 %v625, 7
        %v627 = vstv %s624
        %v628 = vadd.s32 %v627, %v626
        %s629 = sld [smem:[#allocation4]]
        %s630 = sld [smem:[#allocation4 + $0x1]]
        %v631 = vstv %s629
        %vm632 = vcmp.ge.s32.totalorder %v628, %v631
        %v633 = vstv %s630
        %vm634 = vcmp.lt.s32.totalorder %v628, %v633
        %vm635 = vmand %vm632, %vm634
        %v636 = vsel %vm635, 1, 0
        %vm637 = vcmp.eq.s32.totalorder %v636, 1
        %v638 = vsel %vm637, %v621, -inf
        %v639 = vrot.slane %v638, 4
        %v640 = vmax.f32 %v638, %v639
        %v641 = vrot.slane %v640, 2
        %v642 = vmax.f32 %v640, %v641
        %v643 = vrot.slane %v642, 1
        %v644 = vmax.f32 %v642, %v643
        %s645 = sld [smem:[#allocation4 + $0x2]]
        %vm646 = vcmp.ge.s32.totalorder %v628, %v633
        %v647 = vstv %s645
        %vm648 = vcmp.lt.s32.totalorder %v628, %v647
        %vm649 = vmand %vm646, %vm648
        %v650 = vsel %vm649, 1, 0
        %vm651 = vcmp.eq.s32.totalorder %v650, 1
        %v652 = vsel %vm651, %v621, -inf
        %v653 = vrot.slane %v652, 4
        %v654 = vmax.f32 %v652, %v653
        %v655 = vrot.slane %v654, 2
        %v656 = vmax.f32 %v654, %v655
        %v657 = vrot.slane %v656, 1
        %v658 = vmax.f32 %v656, %v657
        %vm659 = vcmask 1040384
        %v660 = vsel %vm659, %v644, %v658
        %v661 = vld [vmem:[#allocation2] sm:$0x3]
        %v662 = vmax.f32 %v661, %v660
        %663 = vst [vmem:[#allocation2] sm:$0x3] %v662
        %p664 = scmp.eq.s32.totalorder %s37, 1
        // Predicated region
        $region69: #{tpu_custom_call.1} parent=55 // pred_check
          %p665 = pneg %p664
        $region70: #{tpu_custom_call.1} parent=55 // pred_check_branch
          %667 = sbr.rel (%p665) target = $region72
        $region71: #{tpu_custom_call.1} parent=55 // pred_region
          %v668 = vld [vmem:[#allocation2] sm:$0x3]
          %669 = vst [vmem:[%s378] sm:$0x3] %v668
        $region72: #{tpu_custom_call.1} parent=55 // pred_fallthru
          _
        %s670 = sand.u32 %s250, 1
        %s671 = scalar_lea.sflag [#allocation7], %s670
        %s672 = sand.u32 %s250, 1
        %s673 = smul.addr %s672, 2
        %s674 = scalar_lea.vmem [#allocation10], %s673
        // Predicated region
        $region73: #{tpu_custom_call.1} parent=55 // pred_check
          %p675 = pneg %p260
        $region74: #{tpu_custom_call.1} parent=55 // pred_check_branch
          %677 = sbr.rel (%p675) target = $region76
        $region75: #{tpu_custom_call.1} parent=55 // pred_region
          %s679 = ssub.s32 32, 32
          %680 = vsyncadd %s671, %s679
          %s681 = smul.addr %s36, 32
          %s682 = scalar_lea.hbm %s10, %s681
          %s684 = sshll.u32 %s674, 4
          %s685 = int_to_ptr.vmem [resolvable:$true] %s684
          %687 = dma.vmem_to_hbm [thread:$0]  %s685, 32, %s682, %s671
        $region76: #{tpu_custom_call.1} parent=55 // pred_fallthru
          _
      $region56: #{tpu_custom_call.1} parent=5 // pred_fallthru
        _
      %p688 = scmp.le.s32.totalorder 2, %s27
      // Predicated region
      $region77: #{tpu_custom_call.1} parent=5 // pred_check
        %p689 = pneg %p688
      $region78: #{tpu_custom_call.1} parent=5 // pred_check_branch
        %691 = sbr.rel (%p689) target = $region80
      $region79: #{tpu_custom_call.1} parent=5 // pred_region
        %s692 = ssub.s32 %s27, 2
        // Predicated region
        $region81: #{tpu_custom_call.1} parent=79 // pred_check
          %p693 = pneg %p266
        $region82: #{tpu_custom_call.1} parent=79 // pred_check_branch
          %695 = sbr.rel (%p693) target = $region84
        $region83: #{tpu_custom_call.1} parent=79 // pred_region
          %s696 = sand.u32 %s251, 1
          %s697 = scalar_lea.sflag [#allocation7], %s696
          %s698 = sand.u32 %s251, 1
          %s699 = smul.addr %s698, 2
          %s700 = scalar_lea.vmem [#allocation10], %s699
          %701 = dma.done %s697, 32
        $region84: #{tpu_custom_call.1} parent=79 // pred_fallthru
          _
      $region80: #{tpu_custom_call.1} parent=5 // pred_fallthru
        _
    $region6: #{tpu_custom_call.1} parent=1 // loop_footer
      %s31 = sadd.s32 1, %s27
    $region7: #{tpu_custom_call.1} parent=1 // loop_footer_branch
      %26 = sbr.rel target = $region3
    $region8: #{tpu_custom_call.1} parent=1 // loop_exit
      _
    %702 = vsyncpa [#allocation6], 1
    %s703 = scalar_lea.sflag [#allocation6], 1
    %704 = vsyncpa %s703, 1
    %705 = vsyncpa [#allocation9], 1
    %706 = vsyncpa [#allocation7], 1
    %s707 = scalar_lea.sflag [#allocation7], 1
    %708 = vsyncpa %s707, 1

</llo_original>
